<compile_context>
chip_gen: v5e
topology: v5e:2x2
jax: 0.10.0
libtpu: 0.0.40
codegen_flags: <defaults>
</compile_context>

<pallas_src>
from functools import partial

import jax
import jax.numpy as jnp
from jax.experimental import pallas as pl
from jax.experimental.pallas import tpu as pltpu


def _head_kernel(x_ref, wk_ref, bk_ref, wq_ref, bq_ref, wv_ref, bv_ref, o_ref,
                 *, causal, compute_dtype):
    # x_ref: (T, C)  | w*_ref: (C, H) | b*_ref: (1, H) | o_ref: (T, H)
    T = x_ref.shape[0]

    x = x_ref[...].astype(compute_dtype)                        # bf16 MXU operand

    def proj(w_ref, b_ref):
        # bf16 x bf16 -> f32 accumulate, then f32 bias add.
        return (jnp.dot(x, w_ref[...].astype(compute_dtype),
                        preferred_element_type=jnp.float32)
                + b_ref[...])                                    # (T, H) f32

    k = proj(wk_ref, bk_ref)
    q = proj(wq_ref, bq_ref)
    v = proj(wv_ref, bv_ref)

    # scores = k @ q^T (module semantics: no 1/sqrt(H) scaling), contracted on
    # H of both operands -- no explicit transpose materialized.
    s = jax.lax.dot_general(
        k.astype(compute_dtype), q.astype(compute_dtype),
        dimension_numbers=(((1,), (1,)), ((), ())),
        preferred_element_type=jnp.float32)                      # (T, T) f32

    if causal:
        row = jax.lax.broadcasted_iota(jnp.int32, (T, T), 0)
        col = jax.lax.broadcasted_iota(jnp.int32, (T, T), 1)
        s = jnp.where(col <= row, s, -jnp.inf)

    # Numerically stable softmax, all in f32, exact divide (no approx recip).
    m = jnp.max(s, axis=-1, keepdims=True)
    p = jnp.exp(s - m)
    p = p / jnp.sum(p, axis=-1, keepdims=True)

    # TODO(synk): dropout on p would go here in training mode.
    o = jnp.dot(p.astype(compute_dtype), v.astype(compute_dtype),
                preferred_element_type=jnp.float32)              # (T, H) f32
    o_ref[...] = o.astype(o_ref.dtype)


def head_forward(x, wk, bk, wq, bq, wv, bv, *, head_type="decoder",
                 matmul_dtype=jnp.bfloat16):
    """x: (B, T, C); w*: (C, H); b*: (1, H). Returns (B, T, H)."""
    B, T, C = x.shape
    H = wk.shape[1]
    causal = head_type == "decoder"

    weight_spec = pl.BlockSpec((C, H), lambda b: (0, 0))   # constant block: fetched once
    bias_spec = pl.BlockSpec((1, H), lambda b: (0, 0))

    return pl.pallas_call(
        partial(_head_kernel, causal=causal, compute_dtype=matmul_dtype),
        out_shape=jax.ShapeDtypeStruct((B, T, H), x.dtype),
        grid=(B,),
        in_specs=[
            pl.BlockSpec((None, T, C), lambda b: (b, 0, 0)),    # x: one batch per step
            weight_spec, bias_spec,                             # key
            weight_spec, bias_spec,                             # query
            weight_spec, bias_spec,                             # value
        ],
        out_specs=pl.BlockSpec((None, T, H), lambda b: (b, 0, 0)),
        compiler_params=pltpu.CompilerParams(
            dimension_semantics=("parallel",)),                 # megacore-shard batch
    )(x, wk, bk, wq, bq, wv, bv)


def head_reference(x, wk, bk, wq, bq, wv, bv, *, matmul_dtype=jnp.float32):
    # Pure-JAX reference mirroring the PyTorch forward (eval mode). With
    # matmul_dtype=bf16 it replicates the kernel's matmul numerics exactly
    # (bf16 operands, f32 accumulation) for a tight structural check.
    md = matmul_dtype

    def proj(w, b):
        return jnp.einsum("btc,ch->bth", x.astype(md), w.astype(md),
                          preferred_element_type=jnp.float32) + b

    k = proj(wk, bk)
    q = proj(wq, bq)
    v = proj(wv, bv)
    s = jnp.einsum("bth,bsh->bts", k.astype(md), q.astype(md),
                   preferred_element_type=jnp.float32)
    T = x.shape[1]
    mask = jnp.tril(jnp.ones((T, T), dtype=bool))
    s = jnp.where(mask, s, -jnp.inf)
    p = jax.nn.softmax(s, axis=-1)
    return jnp.einsum("bts,bsh->bth", p.astype(md), v.astype(md),
                      preferred_element_type=jnp.float32)


if __name__ == "__main__":
    # Head(head_size=16, batch_size=2, tokens_per_batch=8, channel_size=32)
    B, T, C, H = 2, 8, 32, 16

    key = jax.random.PRNGKey(0)
    kx, kwk, kbk, kwq, kbq, kwv, kbv = jax.random.split(key, 7)

    x = jax.random.normal(kx, (B, T, C), dtype=jnp.float32)

    # Parameters are built ONCE in the layouts the kernel consumes directly
    # (biases as (1, H) row vectors) -- no per-call reshape/concat in the wrapper.
    scale = 1.0 / jnp.sqrt(jnp.float32(C))
    wk = jax.random.normal(kwk, (C, H), jnp.float32) * scale
    bk = (jax.random.normal(kbk, (H,), jnp.float32) * 0.01).reshape(1, H)
    wq = jax.random.normal(kwq, (C, H), jnp.float32) * scale
    bq = (jax.random.normal(kbq, (H,), jnp.float32) * 0.01).reshape(1, H)
    wv = jax.random.normal(kwv, (C, H), jnp.float32) * scale
    bv = (jax.random.normal(kbv, (H,), jnp.float32) * 0.01).reshape(1, H)

    out = head_forward(x, wk, bk, wq, bq, wv, bv)
    out = jax.block_until_ready(out)
    assert out.shape == (B, T, H)

    # Tight check vs a reference with matched matmul numerics (bf16 operands,
    # f32 accumulation) -- verifies the kernel structure exactly.
    ref_matched = head_reference(x, wk, bk, wq, bq, wv, bv,
                                 matmul_dtype=jnp.bfloat16)
    assert jnp.allclose(out, ref_matched, atol=2e-3, rtol=2e-3), \
        "mismatch vs matched-precision JAX reference"

    # Loose sanity check vs the full-f32 reference: quantifies the bf16
    # MXU-operand tradeoff recommended for v5e/v6e/v7x.
    ref_f32 = head_reference(x, wk, bk, wq, bq, wv, bv,
                             matmul_dtype=jnp.float32)
    assert jnp.allclose(out, ref_f32, atol=1e-1, rtol=1e-1), \
        "bf16-operand result drifted too far from f32 reference"

    print("KERNEL_OK")
</pallas_src>

<mosaic_0001>
module attributes {stable_mosaic.version = 11 : i64} {
  func.func @_head_kernel(%arg0: i32, %arg1: memref<1x8x32xf32, #tpu.memory_space<vmem>>, %arg2: memref<32x16xf32, #tpu.memory_space<vmem>>, %arg3: memref<1x16xf32, #tpu.memory_space<vmem>>, %arg4: memref<32x16xf32, #tpu.memory_space<vmem>>, %arg5: memref<1x16xf32, #tpu.memory_space<vmem>>, %arg6: memref<32x16xf32, #tpu.memory_space<vmem>>, %arg7: memref<1x16xf32, #tpu.memory_space<vmem>>, %arg8: memref<1x8x16xf32, #tpu.memory_space<vmem>>) attributes {dimension_semantics = [#tpu.dimension_semantics<parallel>], iteration_bounds = array<i64: 2>, scalar_prefetch = 0 : i64, scratch_operands = 0 : i64, tpu.core_type = #tpu.core_type<tc>, window_params = [{transform_indices = @transform_0, window_bounds = array<i64: 1, 8, 32>}, {pipeline_mode = #tpu.pipeline_mode<synchronous>, transform_indices = @transform_1, window_bounds = array<i64: 32, 16>}, {pipeline_mode = #tpu.pipeline_mode<synchronous>, transform_indices = @transform_2, window_bounds = array<i64: 1, 16>}, {pipeline_mode = #tpu.pipeline_mode<synchronous>, transform_indices = @transform_3, window_bounds = array<i64: 32, 16>}, {pipeline_mode = #tpu.pipeline_mode<synchronous>, transform_indices = @transform_4, window_bounds = array<i64: 1, 16>}, {pipeline_mode = #tpu.pipeline_mode<synchronous>, transform_indices = @transform_5, window_bounds = array<i64: 32, 16>}, {pipeline_mode = #tpu.pipeline_mode<synchronous>, transform_indices = @transform_6, window_bounds = array<i64: 1, 16>}, {transform_indices = @transform_7, window_bounds = array<i64: 1, 8, 16>}]} {
    %c0 = arith.constant 0 : index
    %c0_0 = arith.constant 0 : index
    %c0_1 = arith.constant 0 : index
    %0 = vector.load %arg1[%c0, %c0_0, %c0_1] : memref<1x8x32xf32, #tpu.memory_space<vmem>>, vector<1x8x32xf32>
    %1 = vector.shape_cast %0 : vector<1x8x32xf32> to vector<8x32xf32>
    %2 = arith.truncf %1 : vector<8x32xf32> to vector<8x32xbf16>
    %c0_2 = arith.constant 0 : index
    %c0_3 = arith.constant 0 : index
    %3 = vector.load %arg2[%c0_2, %c0_3] : memref<32x16xf32, #tpu.memory_space<vmem>>, vector<32x16xf32>
    %4 = arith.truncf %3 : vector<32x16xf32> to vector<32x16xbf16>
    %cst = arith.constant dense<0.000000e+00> : vector<8x16xf32>
    %5 = tpu.matmul %2, %4, %cst {dimension_numbers = #tpu.dot_dimension_numbers<[1], [0], [0], [1], [0, 0, 1, 1], [], []>} : vector<8x32xbf16>, vector<32x16xbf16>, vector<8x16xf32> -> vector<8x16xf32>
    %c0_4 = arith.constant 0 : index
    %c0_5 = arith.constant 0 : index
    %6 = vector.load %arg3[%c0_4, %c0_5] : memref<1x16xf32, #tpu.memory_space<vmem>>, vector<1x16xf32>
    %7 = vector.broadcast %6 : vector<1x16xf32> to vector<8x16xf32>
    %8 = arith.addf %5, %7 : vector<8x16xf32>
    %c0_6 = arith.constant 0 : index
    %c0_7 = arith.constant 0 : index
    %9 = vector.load %arg4[%c0_6, %c0_7] : memref<32x16xf32, #tpu.memory_space<vmem>>, vector<32x16xf32>
    %10 = arith.truncf %9 : vector<32x16xf32> to vector<32x16xbf16>
    %cst_8 = arith.constant dense<0.000000e+00> : vector<8x16xf32>
    %11 = tpu.matmul %2, %10, %cst_8 {dimension_numbers = #tpu.dot_dimension_numbers<[1], [0], [0], [1], [0, 0, 1, 1], [], []>} : vector<8x32xbf16>, vector<32x16xbf16>, vector<8x16xf32> -> vector<8x16xf32>
    %c0_9 = arith.constant 0 : index
    %c0_10 = arith.constant 0 : index
    %12 = vector.load %arg5[%c0_9, %c0_10] : memref<1x16xf32, #tpu.memory_space<vmem>>, vector<1x16xf32>
    %13 = vector.broadcast %12 : vector<1x16xf32> to vector<8x16xf32>
    %14 = arith.addf %11, %13 : vector<8x16xf32>
    %c0_11 = arith.constant 0 : index
    %c0_12 = arith.constant 0 : index
    %15 = vector.load %arg6[%c0_11, %c0_12] : memref<32x16xf32, #tpu.memory_space<vmem>>, vector<32x16xf32>
    %16 = arith.truncf %15 : vector<32x16xf32> to vector<32x16xbf16>
    %cst_13 = arith.constant dense<0.000000e+00> : vector<8x16xf32>
    %17 = tpu.matmul %2, %16, %cst_13 {dimension_numbers = #tpu.dot_dimension_numbers<[1], [0], [0], [1], [0, 0, 1, 1], [], []>} : vector<8x32xbf16>, vector<32x16xbf16>, vector<8x16xf32> -> vector<8x16xf32>
    %c0_14 = arith.constant 0 : index
    %c0_15 = arith.constant 0 : index
    %18 = vector.load %arg7[%c0_14, %c0_15] : memref<1x16xf32, #tpu.memory_space<vmem>>, vector<1x16xf32>
    %19 = vector.broadcast %18 : vector<1x16xf32> to vector<8x16xf32>
    %20 = arith.addf %17, %19 : vector<8x16xf32>
    %21 = arith.truncf %8 : vector<8x16xf32> to vector<8x16xbf16>
    %22 = arith.truncf %14 : vector<8x16xf32> to vector<8x16xbf16>
    %cst_16 = arith.constant dense<0.000000e+00> : vector<8x8xf32>
    %23 = tpu.matmul %21, %22, %cst_16 {dimension_numbers = #tpu.dot_dimension_numbers<[1], [1], [0], [0], [0, 0, 1, 0], [], []>} : vector<8x16xbf16>, vector<8x16xbf16>, vector<8x8xf32> -> vector<8x8xf32>
    %24 = tpu.iota {dimensions = array<i32: 0>} : vector<8x8xi32>
    %25 = tpu.iota {dimensions = array<i32: 1>} : vector<8x8xi32>
    %26 = arith.cmpi sle, %25, %24 : vector<8x8xi32>
    %cst_17 = arith.constant 0xFF800000 : f32
    %27 = vector.broadcast %cst_17 : f32 to vector<8x8xf32>
    %28 = arith.select %26, %23, %27 : vector<8x8xi1>, vector<8x8xf32>
    %cst_18 = arith.constant dense<0xFF800000> : vector<8xf32>
    %29 = vector.multi_reduction <maximumf>, %28, %cst_18 [1] : vector<8x8xf32> to vector<8xf32>
    %30 = vector.shape_cast %29 : vector<8xf32> to vector<8x1xf32>
    %31 = vector.broadcast %30 : vector<8x1xf32> to vector<8x8xf32>
    %32 = arith.subf %28, %31 : vector<8x8xf32>
    %33 = math.exp %32 : vector<8x8xf32>
    %cst_19 = arith.constant dense<0.000000e+00> : vector<8xf32>
    %34 = vector.multi_reduction <add>, %33, %cst_19 [1] : vector<8x8xf32> to vector<8xf32>
    %35 = vector.shape_cast %34 : vector<8xf32> to vector<8x1xf32>
    %36 = vector.broadcast %35 : vector<8x1xf32> to vector<8x8xf32>
    %37 = arith.divf %33, %36 : vector<8x8xf32>
    %38 = arith.truncf %37 : vector<8x8xf32> to vector<8x8xbf16>
    %39 = arith.truncf %20 : vector<8x16xf32> to vector<8x16xbf16>
    %cst_20 = arith.constant dense<0.000000e+00> : vector<8x16xf32>
    %40 = tpu.matmul %38, %39, %cst_20 {dimension_numbers = #tpu.dot_dimension_numbers<[1], [0], [0], [1], [0, 0, 1, 1], [], []>} : vector<8x8xbf16>, vector<8x16xbf16>, vector<8x16xf32> -> vector<8x16xf32>
    %c0_21 = arith.constant 0 : index
    %c0_22 = arith.constant 0 : index
    %c0_23 = arith.constant 0 : index
    %41 = vector.load %arg8[%c0_21, %c0_22, %c0_23] : memref<1x8x16xf32, #tpu.memory_space<vmem>>, vector<1x8x16xf32>
    %42 = vector.shape_cast %41 : vector<1x8x16xf32> to vector<8x16xf32>
    %43 = vector.shape_cast %40 : vector<8x16xf32> to vector<1x8x16xf32>
    tpu.vector_store %arg8[%c0_21, %c0_22, %c0_23], %43 {strides = array<i32>} : memref<1x8x16xf32, #tpu.memory_space<vmem>>, vector<1x8x16xf32>,
    return
  }
  func.func @transform_0(%arg0: i32) -> (i32, i32, i32) {
    %c0_i32 = arith.constant 0 : i32
    %c0_i32_0 = arith.constant 0 : i32
    %c0_i32_1 = arith.constant 0 : i32
    return %arg0, %c0_i32, %c0_i32_0 : i32, i32, i32
  }
  func.func @transform_1(%arg0: i32) -> (i32, i32) {
    %c0_i32 = arith.constant 0 : i32
    %c0_i32_0 = arith.constant 0 : i32
    %c0_i32_1 = arith.constant 0 : i32
    return %c0_i32, %c0_i32_0 : i32, i32
  }
  func.func @transform_2(%arg0: i32) -> (i32, i32) {
    %c0_i32 = arith.constant 0 : i32
    %c0_i32_0 = arith.constant 0 : i32
    %c0_i32_1 = arith.constant 0 : i32
    return %c0_i32, %c0_i32_0 : i32, i32
  }
  func.func @transform_3(%arg0: i32) -> (i32, i32) {
    %c0_i32 = arith.constant 0 : i32
    %c0_i32_0 = arith.constant 0 : i32
    %c0_i32_1 = arith.constant 0 : i32
    return %c0_i32, %c0_i32_0 : i32, i32
  }
  func.func @transform_4(%arg0: i32) -> (i32, i32) {
    %c0_i32 = arith.constant 0 : i32
    %c0_i32_0 = arith.constant 0 : i32
    %c0_i32_1 = arith.constant 0 : i32
    return %c0_i32, %c0_i32_0 : i32, i32
  }
  func.func @transform_5(%arg0: i32) -> (i32, i32) {
    %c0_i32 = arith.constant 0 : i32
    %c0_i32_0 = arith.constant 0 : i32
    %c0_i32_1 = arith.constant 0 : i32
    return %c0_i32, %c0_i32_0 : i32, i32
  }
  func.func @transform_6(%arg0: i32) -> (i32, i32) {
    %c0_i32 = arith.constant 0 : i32
    %c0_i32_0 = arith.constant 0 : i32
    %c0_i32_1 = arith.constant 0 : i32
    return %c0_i32, %c0_i32_0 : i32, i32
  }
  func.func @transform_7(%arg0: i32) -> (i32, i32, i32) {
    %c0_i32 = arith.constant 0 : i32
    %c0_i32_0 = arith.constant 0 : i32
    %c0_i32_1 = arith.constant 0 : i32
    return %arg0, %c0_i32, %c0_i32_0 : i32, i32, i32
  }
}

</mosaic_0001>

<llo_original>
// kernel: tpu_custom_call.1
$region0: #{tpu_custom_call.1}
  #allocation0 [shape = 'u32[]', space=smem, size = 0x4, offset = 0x4, fixed_abs, tag = 'smem constant byte address 0x4 - core index']
  #allocation1 [shape = 'u32[72,128]{1,0:T(1,128)}', space=vmem, size = 0x9000, scoped, tag = 'internal scratch']
  %s0 = inlined_call_operand.vmem [shape: f32[2,8,32], index: 0, kind: input, shape index: {}]
  %s1 = inlined_call_operand.vmem [shape: f32[32,16], index: 1, kind: input, shape index: {}]
  %s2 = inlined_call_operand.vmem [shape: f32[1,16], index: 2, kind: input, shape index: {}]
  %s3 = inlined_call_operand.vmem [shape: f32[32,16], index: 3, kind: input, shape index: {}]
  %s4 = inlined_call_operand.vmem [shape: f32[1,16], index: 4, kind: input, shape index: {}]
  %s5 = inlined_call_operand.vmem [shape: f32[32,16], index: 5, kind: input, shape index: {}]
  %s6 = inlined_call_operand.vmem [shape: f32[1,16], index: 6, kind: input, shape index: {}]
  %s7 = inlined_call_operand.hbm [shape: f32[2,8,16], index: 7, kind: output, shape index: {}]
  %s8 = sld [smem:[#allocation0]]
  $region61: #{tpu_custom_call.1} parent=0
    _
  %s10 = ssub.s32 1, %s8
  %s11 = scalar_select 0, %s10, %s8
  $region1: #{tpu_custom_call.1} parent=0
    #allocation2 [shape = 'u8[8192]{0}', space=vmem, size = 0x2000, scoped, tag = 'output window, operand 0']
    #allocation3 [shape = 's32[2]{0}', space=sflag, size = 0x8, scoped, tag = 'scoped memory for tpu_custom_call.1']
    %12 = vsyncpa [#allocation3], 0
    %s13 = scalar_lea.sflag [#allocation3], 1
    %14 = vsyncpa %s13, 0
    loop: start=0, step=1, limit=4
    $region2: #{tpu_custom_call.1} parent=1 // loop_pre_header
      _
    $region3: #{tpu_custom_call.1} parent=1 // loop_header
      %s16 = sphi 0, %s20
      %p17 = scmp.ge.s32.totalorder %s16, 4
      %s26 = sphi 0, %s28
      %s29 = sphi 0, %s26
      %s30 = sphi 0, %s29
      %s46 = sphi 0, %s30
      %s50 = sphi 0, %s50
      %s52 = sphi 0, %s50
      %s53 = sphi 0, %s52
      %s67 = sphi 0, %s53
      %s71 = sphi 0, %s71
      %s73 = sphi 0, %s71
      %s74 = sphi 0, %s73
      %s88 = sphi 0, %s74
      %s92 = sphi 0, %s92
      %s94 = sphi 0, %s92
      %s95 = sphi 0, %s94
      %s109 = sphi 0, %s95
      %s113 = sphi 0, %s113
      %s115 = sphi 0, %s113
      %s116 = sphi 0, %s115
      %s130 = sphi 0, %s116
      %s134 = sphi 0, %s134
      %s136 = sphi 0, %s134
      %s137 = sphi 0, %s136
      %s151 = sphi 0, %s137
      %s155 = sphi 0, %s155
      %s157 = sphi 0, %s155
      %s158 = sphi 0, %s157
      %s172 = sphi 0, %s158
      %s178 = sphi 0, %s180
      %s181 = sphi 0, %s178
      %s182 = sphi 0, %s181
      %s198 = sphi 0, %s182
    $region4: #{tpu_custom_call.1} parent=1 // loop_header_branch
      %19 = sbr.rel (%p17) target = $region8
    $region5: #{tpu_custom_call.1} parent=1 // loop_body
      %s21 = ssub.s32 %s16, 1
      %s22 = ssub.s32 %s16, 2
      %s23 = sadd.s32 %s16, 1
      %s24 = ssub.s32 %s16, %s23
      %p25 = scmp.eq.s32.totalorder %s24, 0
      %s27 = sadd.s32 %s26, 1
      %s28 = scalar_select %p25, %s26, %s27
      %p31 = pneg %p25
      %p32 = scmp.eq.s32.totalorder %s16, 1
      %p33 = por %p31, %p32
      %p34 = scmp.ne.s32.totalorder %s26, %s29
      %p35 = scmp.eq.s32.totalorder %s16, 0
      %p36 = por %p34, %p35
      %p37 = scmp.ne.s32.totalorder %s26, %s29
      %p38 = scmp.eq.s32.totalorder %s21, 1
      %p39 = por %p37, %p38
      %p40 = scmp.ne.s32.totalorder %s29, %s30
      %p41 = scmp.eq.s32.totalorder %s21, 0
      %p42 = por %p40, %p41
      %p43 = scmp.ne.s32.totalorder %s29, %s30
      %p44 = scmp.eq.s32.totalorder %s22, 1
      %p45 = por %p43, %p44
      %p47 = scmp.ne.s32.totalorder %s30, %s46
      %p48 = scmp.eq.s32.totalorder %s22, 0
      %p49 = por %p47, %p48
      %s51 = sadd.s32 %s50, 1
      %p54 = scmp.eq.s32.totalorder %s16, 1
      %p55 = scmp.ne.s32.totalorder %s50, %s52
      %p56 = scmp.eq.s32.totalorder %s16, 0
      %p57 = por %p55, %p56
      %p58 = scmp.ne.s32.totalorder %s50, %s52
      %p59 = scmp.eq.s32.totalorder %s21, 1
      %p60 = por %p58, %p59
      %p61 = scmp.ne.s32.totalorder %s52, %s53
      %p62 = scmp.eq.s32.totalorder %s21, 0
      %p63 = por %p61, %p62
      %p64 = scmp.ne.s32.totalorder %s52, %s53
      %p65 = scmp.eq.s32.totalorder %s22, 1
      %p66 = por %p64, %p65
      %p68 = scmp.ne.s32.totalorder %s53, %s67
      %p69 = scmp.eq.s32.totalorder %s22, 0
      %p70 = por %p68, %p69
      %s72 = sadd.s32 %s71, 1
      %p75 = scmp.eq.s32.totalorder %s16, 1
      %p76 = scmp.ne.s32.totalorder %s71, %s73
      %p77 = scmp.eq.s32.totalorder %s16, 0
      %p78 = por %p76, %p77
      %p79 = scmp.ne.s32.totalorder %s71, %s73
      %p80 = scmp.eq.s32.totalorder %s21, 1
      %p81 = por %p79, %p80
      %p82 = scmp.ne.s32.totalorder %s73, %s74
      %p83 = scmp.eq.s32.totalorder %s21, 0
      %p84 = por %p82, %p83
      %p85 = scmp.ne.s32.totalorder %s73, %s74
      %p86 = scmp.eq.s32.totalorder %s22, 1
      %p87 = por %p85, %p86
      %p89 = scmp.ne.s32.totalorder %s74, %s88
      %p90 = scmp.eq.s32.totalorder %s22, 0
      %p91 = por %p89, %p90
      %s93 = sadd.s32 %s92, 1
      %p96 = scmp.eq.s32.totalorder %s16, 1
      %p97 = scmp.ne.s32.totalorder %s92, %s94
      %p98 = scmp.eq.s32.totalorder %s16, 0
      %p99 = por %p97, %p98
      %p100 = scmp.ne.s32.totalorder %s92, %s94
      %p101 = scmp.eq.s32.totalorder %s21, 1
      %p102 = por %p100, %p101
      %p103 = scmp.ne.s32.totalorder %s94, %s95
      %p104 = scmp.eq.s32.totalorder %s21, 0
      %p105 = por %p103, %p104
      %p106 = scmp.ne.s32.totalorder %s94, %s95
      %p107 = scmp.eq.s32.totalorder %s22, 1
      %p108 = por %p106, %p107
      %p110 = scmp.ne.s32.totalorder %s95, %s109
      %p111 = scmp.eq.s32.totalorder %s22, 0
      %p112 = por %p110, %p111
      %s114 = sadd.s32 %s113, 1
      %p117 = scmp.eq.s32.totalorder %s16, 1
      %p118 = scmp.ne.s32.totalorder %s113, %s115
      %p119 = scmp.eq.s32.totalorder %s16, 0
      %p120 = por %p118, %p119
      %p121 = scmp.ne.s32.totalorder %s113, %s115
      %p122 = scmp.eq.s32.totalorder %s21, 1
      %p123 = por %p121, %p122
      %p124 = scmp.ne.s32.totalorder %s115, %s116
      %p125 = scmp.eq.s32.totalorder %s21, 0
      %p126 = por %p124, %p125
      %p127 = scmp.ne.s32.totalorder %s115, %s116
      %p128 = scmp.eq.s32.totalorder %s22, 1
      %p129 = por %p127, %p128
      %p131 = scmp.ne.s32.totalorder %s116, %s130
      %p132 = scmp.eq.s32.totalorder %s22, 0
      %p133 = por %p131, %p132
      %s135 = sadd.s32 %s134, 1
      %p138 = scmp.eq.s32.totalorder %s16, 1
      %p139 = scmp.ne.s32.totalorder %s134, %s136
      %p140 = scmp.eq.s32.totalorder %s16, 0
      %p141 = por %p139, %p140
      %p142 = scmp.ne.s32.totalorder %s134, %s136
      %p143 = scmp.eq.s32.totalorder %s21, 1
      %p144 = por %p142, %p143
      %p145 = scmp.ne.s32.totalorder %s136, %s137
      %p146 = scmp.eq.s32.totalorder %s21, 0
      %p147 = por %p145, %p146
      %p148 = scmp.ne.s32.totalorder %s136, %s137
      %p149 = scmp.eq.s32.totalorder %s22, 1
      %p150 = por %p148, %p149
      %p152 = scmp.ne.s32.totalorder %s137, %s151
      %p153 = scmp.eq.s32.totalorder %s22, 0
      %p154 = por %p152, %p153
      %s156 = sadd.s32 %s155, 1
      %p159 = scmp.eq.s32.totalorder %s16, 1
      %p160 = scmp.ne.s32.totalorder %s155, %s157
      %p161 = scmp.eq.s32.totalorder %s16, 0
      %p162 = por %p160, %p161
      %p163 = scmp.ne.s32.totalorder %s155, %s157
      %p164 = scmp.eq.s32.totalorder %s21, 1
      %p165 = por %p163, %p164
      %p166 = scmp.ne.s32.totalorder %s157, %s158
      %p167 = scmp.eq.s32.totalorder %s21, 0
      %p168 = por %p166, %p167
      %p169 = scmp.ne.s32.totalorder %s157, %s158
      %p170 = scmp.eq.s32.totalorder %s22, 1
      %p171 = por %p169, %p170
      %p173 = scmp.ne.s32.totalorder %s158, %s172
      %p174 = scmp.eq.s32.totalorder %s22, 0
      %p175 = por %p173, %p174
      %s176 = ssub.s32 %s16, %s23
      %p177 = scmp.eq.s32.totalorder %s176, 0
      %s179 = sadd.s32 %s178, 1
      %s180 = scalar_select %p177, %s178, %s179
      %p183 = pneg %p177
      %p184 = scmp.eq.s32.totalorder %s16, 1
      %p185 = por %p183, %p184
      %p186 = scmp.ne.s32.totalorder %s178, %s181
      %p187 = scmp.eq.s32.totalorder %s16, 0
      %p188 = por %p186, %p187
      %p189 = scmp.ne.s32.totalorder %s178, %s181
      %p190 = scmp.eq.s32.totalorder %s21, 1
      %p191 = por %p189, %p190
      %p192 = scmp.ne.s32.totalorder %s181, %s182
      %p193 = scmp.eq.s32.totalorder %s21, 0
      %p194 = por %p192, %p193
      %p195 = scmp.ne.s32.totalorder %s181, %s182
      %p196 = scmp.eq.s32.totalorder %s22, 1
      %p197 = por %p195, %p196
      %p199 = scmp.ne.s32.totalorder %s182, %s198
      %p200 = scmp.eq.s32.totalorder %s22, 0
      %p201 = por %p199, %p200
      %p202 = scmp.le.s32.totalorder 1, %s16
      %p203 = scmp.lt.s32.totalorder %s16, 3
      %p204 = pnand %p202, %p203
      %p205 = pneg %p204
      // Predicated region
      $region9: #{tpu_custom_call.1} parent=5 // pred_check
        _
      $region10: #{tpu_custom_call.1} parent=5 // pred_check_branch
        %207 = sbr.rel (%p204) target = $region12
      $region11: #{tpu_custom_call.1} parent=5 // pred_region
        %s208 = ssub.s32 %s16, 1
        // Predicated region
        $region13: #{tpu_custom_call.1} parent=11 // pred_check
          %p209 = pneg %p63
        $region14: #{tpu_custom_call.1} parent=11 // pred_check_branch
          %211 = sbr.rel (%p209) target = $region16
        $region15: #{tpu_custom_call.1} parent=11 // pred_region
          _
        $region16: #{tpu_custom_call.1} parent=11 // pred_fallthru
          _
        // Predicated region
        $region17: #{tpu_custom_call.1} parent=11 // pred_check
          %p212 = pneg %p84
        $region18: #{tpu_custom_call.1} parent=11 // pred_check_branch
          %214 = sbr.rel (%p212) target = $region20
        $region19: #{tpu_custom_call.1} parent=11 // pred_region
          _
        $region20: #{tpu_custom_call.1} parent=11 // pred_fallthru
          _
        // Predicated region
        $region21: #{tpu_custom_call.1} parent=11 // pred_check
          %p215 = pneg %p105
        $region22: #{tpu_custom_call.1} parent=11 // pred_check_branch
          %217 = sbr.rel (%p215) target = $region24
        $region23: #{tpu_custom_call.1} parent=11 // pred_region
          _
        $region24: #{tpu_custom_call.1} parent=11 // pred_fallthru
          _
        // Predicated region
        $region25: #{tpu_custom_call.1} parent=11 // pred_check
          %p218 = pneg %p126
        $region26: #{tpu_custom_call.1} parent=11 // pred_check_branch
          %220 = sbr.rel (%p218) target = $region28
        $region27: #{tpu_custom_call.1} parent=11 // pred_region
          _
        $region28: #{tpu_custom_call.1} parent=11 // pred_fallthru
          _
        // Predicated region
        $region29: #{tpu_custom_call.1} parent=11 // pred_check
          %p221 = pneg %p147
        $region30: #{tpu_custom_call.1} parent=11 // pred_check_branch
          %223 = sbr.rel (%p221) target = $region32
        $region31: #{tpu_custom_call.1} parent=11 // pred_region
          _
        $region32: #{tpu_custom_call.1} parent=11 // pred_fallthru
          _
        // Predicated region
        $region33: #{tpu_custom_call.1} parent=11 // pred_check
          %p224 = pneg %p168
        $region34: #{tpu_custom_call.1} parent=11 // pred_check_branch
          %226 = sbr.rel (%p224) target = $region36
        $region35: #{tpu_custom_call.1} parent=11 // pred_region
          _
        $region36: #{tpu_custom_call.1} parent=11 // pred_fallthru
          _
      $region12: #{tpu_custom_call.1} parent=5 // pred_fallthru
        _
      %p227 = scmp.lt.s32.totalorder %s16, 2
      // Predicated region
      $region37: #{tpu_custom_call.1} parent=5 // pred_check
        %p228 = pneg %p227
      $region38: #{tpu_custom_call.1} parent=5 // pred_check_branch
        %230 = sbr.rel (%p228) target = $region40
      $region39: #{tpu_custom_call.1} parent=5 // pred_region
        // Predicated region
        $region41: #{tpu_custom_call.1} parent=39 // pred_check
          %p231 = pneg %p36
        $region42: #{tpu_custom_call.1} parent=39 // pred_check_branch
          %233 = sbr.rel (%p231) target = $region44
        $region43: #{tpu_custom_call.1} parent=39 // pred_region
          %p234 = scmp.lt.s32.totalorder %s16, 1
          %s235 = scalar_select %p234, %s16, 1
          %s236 = smul.addr %s235, 8
          %s237 = scalar_lea.vmem %s0, %s236
        $region44: #{tpu_custom_call.1} parent=39 // pred_fallthru
          _
      $region40: #{tpu_custom_call.1} parent=5 // pred_fallthru
        _
      %p238 = scmp.le.s32.totalorder 1, %s16
      %p239 = scmp.lt.s32.totalorder %s16, 3
      %p240 = pnand %p238, %p239
      %p241 = pneg %p240
      // Predicated region
      $region45: #{tpu_custom_call.1} parent=5 // pred_check
        _
      $region46: #{tpu_custom_call.1} parent=5 // pred_check_branch
        %243 = sbr.rel (%p240) target = $region48
      $region47: #{tpu_custom_call.1} parent=5 // pred_region
        %s244 = ssub.s32 %s16, 1
        %p245 = scmp.lt.s32.totalorder %s21, 1
        %s246 = scalar_select %p245, %s21, 1
        %s247 = smul.addr %s246, 8
        %s248 = scalar_lea.vmem %s0, %s247
        %p249 = pneg %p42
        %p250 = pneg %p39
        %p251 = pneg %p63
        %p252 = pneg %p60
        %p253 = pneg %p84
        %p254 = pneg %p81
        %p255 = pneg %p105
        %p256 = pneg %p102
        %p257 = pneg %p126
        %p258 = pneg %p123
        %p259 = pneg %p147
        %p260 = pneg %p144
        %p261 = pneg %p168
        %p262 = pneg %p165
        %p263 = pneg %p194
        %p264 = pneg %p191
        %s265 = sand.u32 %s181, 1
        %s266 = scalar_lea.sflag [#allocation3], %s265
        %s267 = sand.u32 %s181, 1
        %s268 = smul.addr %s267, 8
        %s269 = scalar_lea.vmem [#allocation2], %s268
        %p270 = scmp.lt.s32.totalorder %s21, 1
        %s271 = scalar_select %p270, %s21, 1
        %s272 = smul.addr %s271, 8
        %s273 = scalar_lea.vmem %s0, %s272
        %v275 = vld [vmem:[%s273] sm:$0xff]
        %v276 = vpack.c.bf16 %v275, %v275
        %v277 = vld [vmem:[%s1] sm:$0xff]
        %v278 = vld [vmem:[%s1 + $0x8] sm:$0xff]
        %v279 = vld [vmem:[%s1 + $0x10] sm:$0xff]
        %v280 = vld [vmem:[%s1 + $0x18] sm:$0xff]
        %v281 = vpack.c.bf16 %v278, %v277
        %v282 = vpack.c.bf16 %v280, %v279
        %v283 = vld [vmem:[%s2] sm:$0x1]
        %v285 = vperm.slane %v283, 0
        %vm287 = vcmask 261120
        %v289 = vsel %vm287, %v276, 0
        %291 = vmatpush.bf16.msra.mxu0 0
        %292 = vmatpush.bf16.msra.mxu0 0
        %293 = vmatpush.bf16.msra.mxu0 0
        %294 = vmatpush.bf16.msra.mxu0 0
        %295 = vmatpush.bf16.msra.mxu0 0
        %296 = vmatpush.bf16.msra.mxu0 0
        %297 = vmatpush.bf16.msra.mxu0 %v282
        %298 = vmatpush.bf16.msra.mxu0 %v281
        %299 = vmatmul.bf16.gmra.mxu0 %v289
        %v300 = vpop.f32.mrf.mxu0
        %v301 = vadd.f32 %v285, %v300
        %v302 = vpop.f32.mrf.mxu0
        %303 = vdwg.mxu0
        %v304 = vld [vmem:[%s3] sm:$0xff]
        %v305 = vld [vmem:[%s3 + $0x8] sm:$0xff]
        %v306 = vld [vmem:[%s3 + $0x10] sm:$0xff]
        %v307 = vld [vmem:[%s3 + $0x18] sm:$0xff]
        %v308 = vpack.c.bf16 %v305, %v304
        %v309 = vpack.c.bf16 %v307, %v306
        %v310 = vld [vmem:[%s4] sm:$0x1]
        %v312 = vperm.slane %v310, 0
        %314 = vmatpush.bf16.msra.mxu0 0
        %315 = vmatpush.bf16.msra.mxu0 0
        %316 = vmatpush.bf16.msra.mxu0 0
        %317 = vmatpush.bf16.msra.mxu0 0
        %318 = vmatpush.bf16.msra.mxu0 0
        %319 = vmatpush.bf16.msra.mxu0 0
        %320 = vmatpush.bf16.msra.mxu0 %v309
        %321 = vmatpush.bf16.msra.mxu0 %v308
        %322 = vmatmul.bf16.gmra.mxu0 %v289
        %v323 = vpop.f32.mrf.mxu0
        %v324 = vadd.f32 %v312, %v323
        %v325 = vpop.f32.mrf.mxu0
        %326 = vdwg.mxu0
        %v327 = vld [vmem:[%s5] sm:$0xff]
        %v328 = vld [vmem:[%s5 + $0x8] sm:$0xff]
        %v329 = vld [vmem:[%s5 + $0x10] sm:$0xff]
        %v330 = vld [vmem:[%s5 + $0x18] sm:$0xff]
        %v331 = vpack.c.bf16 %v328, %v327
        %v332 = vpack.c.bf16 %v330, %v329
        %v333 = vld [vmem:[%s6] sm:$0x1]
        %v335 = vperm.slane %v333, 0
        %337 = vmatpush.bf16.msra.mxu0 0
        %338 = vmatpush.bf16.msra.mxu0 0
        %339 = vmatpush.bf16.msra.mxu0 0
        %340 = vmatpush.bf16.msra.mxu0 0
        %341 = vmatpush.bf16.msra.mxu0 0
        %342 = vmatpush.bf16.msra.mxu0 0
        %343 = vmatpush.bf16.msra.mxu0 %v332
        %344 = vmatpush.bf16.msra.mxu0 %v331
        %345 = vmatmul.bf16.gmra.mxu0 %v289
        %v346 = vpop.f32.mrf.mxu0
        %v347 = vadd.f32 %v335, %v346
        %v348 = vpop.f32.mrf.mxu0
        %349 = vdwg.mxu0
        %v350 = vpack.c.bf16 %v301, %v301
        %v351 = vpack.c.bf16 %v324, %v324
        %vm352 = vcmask 130048
        %v354 = vsel %vm352, %v350, 0
        %v357 = vsel %vm352, %v351, 0
        %359 = vmatpush.bf16.xpose.msra.mxu0 0
        %360 = vmatpush.bf16.xpose.msra.mxu0 0
        %361 = vmatpush.bf16.xpose.msra.mxu0 0
        %362 = vmatpush.bf16.xpose.msra.mxu0 0
        %363 = vmatpush.bf16.xpose.msra.mxu0 0
        %364 = vmatpush.bf16.xpose.msra.mxu0 0
        %365 = vmatpush.bf16.xpose.msra.mxu0 0
        %366 = vmatpush.bf16.xpose.msra.mxu0 %v357
        %367 = vmatmul.bf16.gmra.mxu0 %v354
        %v368 = vpop.f32.mrf.mxu0
        %v369 = vadd.f32 0.0, %v368
        %v370 = vpop.f32.mrf.mxu0
        %371 = vdwg.mxu0
        %v372 = vlaneseq
        %v373 = vshrl.u32 %v372, 7
        %v374 = vlaneseq
        %v375 = vand.u32 %v374, 127
        %vm376 = vcmp.le.s32.totalorder %v375, %v373
        %v377 = vsel %vm376, %v369, -inf
        %vm378 = vcmask 64512
        %v379 = vsel %vm378, %v377, -inf
        %380 = vmax.xlane.f32.xlu0 %v379
        %v381 = vpop.xlane.xlu0 %380
        %v382 = vsub.f32 %v377, %v381
        %v383 = vmul.f32 %v382, 1.442695
        %v384 = vpow.pop %v383
        %v385 = vsel %vm378, %v384, 0.0
        %386 = vadd.xlane.f32.xlu0 %v385
        %v387 = vpop.xlane.xlu0 %386
        %v388 = vrcp.pop %v387
        %v389 = vmul.f32 %v387, %v388
        %v390 = vsub.f32 1.0, %v389
        %v391 = vmul.f32 %v388, %v390
        %v392 = vadd.f32 %v388, %v391
        %vm393 = vweird.f32 %v387
        %vm394 = vweird.f32 %v388
        %vm395 = vmor %vm393, %vm394
        %v396 = vsel %vm395, %v388, %v392
        %v397 = vand.u32 2147483647, %v387
        %vm398 = vcmp.eq.f32.partialorder %v397, 8.507059e+37
        %v399 = vand.u32 %v387, 2147483648
        %v400 = vor.u32 1.1754944e-38, %v399
        %v401 = vsel %vm398, %v400, %v396
        %v402 = vmul.f32 %v384, %v401
        %v403 = vpack.c.bf16 %v402, %v402
        %v404 = vpack.c.bf16 %v347, %v347
        %v406 = vsel %vm378, %v403, 0
        %vm408 = vcmask 1043456
        %v410 = vsel %vm408, %v404, 0
        %412 = vmatpush.bf16.msra.mxu0 0
        %413 = vmatpush.bf16.msra.mxu0 0
        %414 = vmatpush.bf16.msra.mxu0 0
        %415 = vmatpush.bf16.msra.mxu0 0
        %416 = vmatpush.bf16.msra.mxu0 0
        %417 = vmatpush.bf16.msra.mxu0 0
        %418 = vmatpush.bf16.msra.mxu0 0
        %419 = vmatpush.bf16.msra.mxu0 %v410
        %420 = vmatmul.bf16.gmra.mxu0 %v406
        %v421 = vpop.f32.mrf.mxu0
        %v422 = vadd.f32 0.0, %v421
        %v423 = vpop.f32.mrf.mxu0
        %424 = vdwg.mxu0
        %425 = vst.msk [vmem:[%s269] sm:$0xff] %vm352, %v422
        %s426 = sand.u32 %s181, 1
        %s427 = scalar_lea.sflag [#allocation3], %s426
        %s428 = sand.u32 %s181, 1
        %s429 = smul.addr %s428, 8
        %s430 = scalar_lea.vmem [#allocation2], %s429
        // Predicated region
        $region49: #{tpu_custom_call.1} parent=47 // pred_check
          %p431 = pneg %p191
        $region50: #{tpu_custom_call.1} parent=47 // pred_check_branch
          %433 = sbr.rel (%p431) target = $region52
        $region51: #{tpu_custom_call.1} parent=47 // pred_region
          %435 = vsyncadd %s427, 0
          %s436 = smul.addr %s21, 8
          %s437 = scalar_lea.hbm %s7, %s436
          %s439 = sshll.u32 %s430, 4
          %s440 = int_to_ptr.vmem [resolvable:$true] %s439
          %s441 = sshll.u32 %s437, 4
          %s442 = int_to_ptr.hbm [resolvable:$true] %s441
          %444 = dma.vmem_to_hbm [thread:$0]  %s440, 128, %s442, %s427
        $region52: #{tpu_custom_call.1} parent=47 // pred_fallthru
          _
      $region48: #{tpu_custom_call.1} parent=5 // pred_fallthru
        _
      %p445 = scmp.le.s32.totalorder 2, %s16
      // Predicated region
      $region53: #{tpu_custom_call.1} parent=5 // pred_check
        %p446 = pneg %p445
      $region54: #{tpu_custom_call.1} parent=5 // pred_check_branch
        %448 = sbr.rel (%p446) target = $region56
      $region55: #{tpu_custom_call.1} parent=5 // pred_region
        %s449 = ssub.s32 %s16, 2
        // Predicated region
        $region57: #{tpu_custom_call.1} parent=55 // pred_check
          %p450 = pneg %p197
        $region58: #{tpu_custom_call.1} parent=55 // pred_check_branch
          %452 = sbr.rel (%p450) target = $region60
        $region59: #{tpu_custom_call.1} parent=55 // pred_region
          %s453 = sand.u32 %s182, 1
          %s454 = scalar_lea.sflag [#allocation3], %s453
          %s455 = sand.u32 %s182, 1
          %s456 = smul.addr %s455, 8
          %s457 = scalar_lea.vmem [#allocation2], %s456
          %459 = dma.done %s454, 128
        $region60: #{tpu_custom_call.1} parent=55 // pred_fallthru
          _
      $region56: #{tpu_custom_call.1} parent=5 // pred_fallthru
        _
    $region6: #{tpu_custom_call.1} parent=1 // loop_footer
      %s20 = sadd.s32 1, %s16
    $region7: #{tpu_custom_call.1} parent=1 // loop_footer_branch
      %15 = sbr.rel target = $region3
    $region8: #{tpu_custom_call.1} parent=1 // loop_exit
      _
    %460 = vsyncpa [#allocation3], 1
    %s461 = scalar_lea.sflag [#allocation3], 1
    %462 = vsyncpa %s461, 1

</llo_original>
